<compile_context>
chip_gen: v6e
topology: v6e:2x2x1
jax: 0.10.0
libtpu: 0.0.40
codegen_flags: <defaults>
</compile_context>

<pallas_src>
import functools

import jax
import jax.numpy as jnp
from jax.experimental import pallas as pl
from jax.experimental.pallas import tpu as pltpu


# ----------------------------------------------------------------------------
# Kernel body
# ----------------------------------------------------------------------------
def _eca_kernel(x_ref, w_ref, o_ref, *, inv_hw):
    # x_ref / o_ref: (Bblk, C, H*W) in VMEM; w_ref: (K,) conv taps in SMEM.
    C = x_ref.shape[1]
    K = w_ref.shape[0]
    pad = (K - 1) // 2

    # ---- AdaptiveAvgPool2d(1): one lane-dense reduction over H*W,
    # accumulated in f32 (avoids materializing a full-width f32 copy of the
    # block for sub-32-bit inputs).
    pooled = jnp.sum(x_ref[...], axis=-1, dtype=jnp.float32) * inv_hw  # (Bblk, C)

    # ---- Conv1d(1, 1, K, padding=(K-1)//2, bias=False) over channels -------
    # conv[c] = sum_k w[k] * y[c + k - pad], zero outside [0, C).
    # K static roll (XLU) + boundary-mask + scalar-FMA steps on the tiny
    # pooled vector; no (C, C) band matrix, no MXU.
    cidx = jax.lax.broadcasted_iota(jnp.int32, pooled.shape, 1)  # hoisted once
    conv = w_ref[pad] * pooled                                   # center tap
    for k in range(K):
        if k == pad:
            continue
        s = pad - k                        # tap k reads y[c - s]
        sh = s % C                         # non-negative static roll amount
        shifted = pooled if sh == 0 else pltpu.roll(pooled, shift=sh, axis=1)
        valid = (cidx >= s) & (cidx < C + s)   # keep only in-range y indices
        conv = conv + w_ref[k] * jnp.where(valid, shifted, 0.0)

    # ---- Sigmoid gate + channel-wise rescale --------------------------------
    x = x_ref[...]
    gate = jax.nn.sigmoid(conv).astype(x.dtype)                  # (Bblk, C)
    # NOTE: gate[:, :, None] is one tiny lanes->sublanes relayout of the
    # (Bblk, C) vector; the kernel is HBM-bandwidth-bound so this XLU work is
    # fully hidden under the block DMA.  Kept in this (proven-lowering) form
    # for robustness rather than re-plumbing the conv into sublane layout.
    o_ref[...] = (x * gate[:, :, None]).astype(o_ref.dtype)


# ----------------------------------------------------------------------------
# Wrapper-side sizing helpers
# ----------------------------------------------------------------------------
def _round_up(x, m):
    return ((x + m - 1) // m) * m


def _vmem_capacity_bytes():
    """Physical VMEM per TensorCore; conservative fallback if query fails."""
    try:
        cap = int(getattr(pltpu.get_tpu_info(), "vmem_capacity_bytes"))
        if cap > 0:
            return cap
    except Exception:
        pass
    return 64 * 1024 * 1024  # v7x per-TC size: safe lower bound everywhere


def _padded_sample_bytes(C, HW, itemsize):
    """VMEM footprint of one (C, HW) sample on (8/16/32, 128) tile padding."""
    sublane = max(8, 32 // max(itemsize, 1))      # 8 for f32, 16 bf16, 32 int8
    return _round_up(C, sublane) * _round_up(HW, 128) * itemsize


def _choose_batch_block(B, per_sample_bytes, budget_bytes):
    """Largest batch block fitting the per-array VMEM budget, then shrunk so
    the grid has >= 4 steps (>= 2 pipelined steps per v7x TensorCore under
    dimension_semantics=('parallel',)) as long as blocks stay >= ~4 MiB;
    otherwise fall back to >= 2 steps when B > 1."""
    bblk = max(1, min(B, budget_bytes // max(per_sample_bytes, 1)))
    min_block_bytes = 4 * 1024 * 1024
    for target_steps in (4, 2):
        if B < target_steps:
            continue
        cand = max(1, B // target_steps)
        if cand >= bblk:
            break  # already have >= target_steps grid steps
        if target_steps == 2 or cand * per_sample_bytes >= min_block_bytes:
            bblk = cand
            break
    return int(bblk)


# ----------------------------------------------------------------------------
# Public entry point
# ----------------------------------------------------------------------------
def eca_forward(x, conv_w, *, donate_x=False):
    """x: (B, C, H, W), conv_w: (1, 1, K) float32 (PyTorch Conv1d weight).

    Set donate_x=True only when the caller can donate x (saves the second
    B*C*H*W HBM buffer via input/output aliasing)."""
    B, C, H, W = x.shape
    HW = H * W
    x2 = x.reshape(B, C, HW)                    # lane-dense: H*W on lanes
    # TODO(synk): for NHWC producers with small H*W and C % 128 == 0 (e.g.
    # 7x7x2048 on v7x), a channels-last (B, HW, C) block avoids masked lane
    # stores; only worthwhile if the input arrives NHWC (a wrapper transpose
    # would cost an extra HBM pass).
    w = conv_w.reshape(-1).astype(jnp.float32)  # (K,) taps -> SMEM
    K = int(w.shape[0])

    itemsize = jnp.dtype(x.dtype).itemsize
    per_sample = _padded_sample_bytes(C, HW, itemsize)

    # Generation-aware budgets: scoped limit ~3/4 of physical VMEM
    # (≈96 MiB on v5e/v6e, ≈48 MiB on v7x -> headroom for Mosaic scratch),
    # per-array block budget such that in+out double-buffered ~ half of it.
    cap = _vmem_capacity_bytes()
    limit_target = (3 * cap) // 4
    block_budget = limit_target // 8

    bblk = _choose_batch_block(B, per_sample, block_budget)
    grid = (pl.cdiv(B, bblk),)

    block_bytes = bblk * per_sample
    needed = 4 * block_bytes + (2 << 20)        # in+out, double-buffered, slack
    vmem_limit = int(min(max(needed, limit_target), cap - (8 << 20)))
    # TODO(synk): very large single samples (padded C*HW*itemsize >~ block
    # budget) need a spatially tiled two-phase variant (pool-accumulate pass,
    # then gate/multiply pass); not needed at these shapes.

    # Purely memory-bound custom call: tell the XLA scheduler so surrounding
    # HLO can overlap with it.
    cost = pl.CostEstimate(
        flops=3 * B * C * HW + 2 * K * B * C,
        transcendentals=B * C,
        bytes_accessed=2 * B * C * HW * itemsize + K * 4,
    )

    kernel = functools.partial(_eca_kernel, inv_hw=1.0 / float(HW))
    out2 = pl.pallas_call(
        kernel,
        out_shape=jax.ShapeDtypeStruct((B, C, HW), x.dtype),
        grid=grid,
        in_specs=[
            pl.BlockSpec((bblk, C, HW), lambda b: (b, 0, 0)),
            pl.BlockSpec(memory_space=pltpu.MemorySpace.SMEM),  # conv taps
        ],
        out_specs=pl.BlockSpec((bblk, C, HW), lambda b: (b, 0, 0)),
        compiler_params=pltpu.CompilerParams(
            dimension_semantics=("parallel",),
            vmem_limit_bytes=vmem_limit,
        ),
        cost_estimate=cost,
        input_output_aliases=({0: 0} if donate_x else {}),
    )(x2, w)
    return out2.reshape(B, C, H, W)


# ----------------------------------------------------------------------------
# Pure-JAX reference mirroring the PyTorch forward
# ----------------------------------------------------------------------------
def eca_reference(x, conv_w):
    B, C, H, W = x.shape
    y = jnp.mean(x, axis=(2, 3))                 # (B, C)
    w = conv_w.reshape(-1)
    K = w.shape[0]
    pad = (K - 1) // 2
    yp = jnp.pad(y, ((0, 0), (pad, pad)))
    conv = sum(w[k] * yp[:, k:k + C] for k in range(K))          # (B, C)
    gate = jax.nn.sigmoid(conv)
    return x * gate[:, :, None, None]


if __name__ == "__main__":
    key = jax.random.PRNGKey(0)
    kx, kw = jax.random.split(key)

    B, C, H, W = 2, 4, 16, 16
    k_size = 3
    x = jax.random.normal(kx, (B, C, H, W), dtype=jnp.float32)

    # Deterministic Conv1d(1, 1, k_size, bias=False) weight, PyTorch-style
    # uniform(-1/sqrt(fan_in), 1/sqrt(fan_in)) init with fan_in = 1 * k_size.
    bound = 1.0 / (k_size ** 0.5)
    conv_w = jax.random.uniform(
        kw, (1, 1, k_size), minval=-bound, maxval=bound, dtype=jnp.float32)

    out = jax.block_until_ready(eca_forward(x, conv_w))
    ref = eca_reference(x, conv_w)
    assert out.shape == x.shape and out.dtype == x.dtype
    assert jnp.allclose(out, ref, rtol=1e-5, atol=1e-5), "mismatch vs reference"

    # Ragged-grid coverage: B not divisible by the chosen batch block
    # (last block is clamped/masked; per-sample results are independent).
    x5 = jax.random.normal(kx, (5, C, H, W), dtype=jnp.float32)
    out5 = jax.block_until_ready(eca_forward(x5, conv_w))
    assert jnp.allclose(out5, eca_reference(x5, conv_w), rtol=1e-5, atol=1e-5), \
        "mismatch vs reference (ragged batch)"

    print("KERNEL_OK")
</pallas_src>

<mosaic_0001>
module attributes {stable_mosaic.version = 11 : i64} {
  func.func @_eca_kernel(%arg0: i32, %arg1: memref<1x4x256xf32, #tpu.memory_space<vmem>>, %arg2: memref<3xf32, #tpu.memory_space<smem>>, %arg3: memref<1x4x256xf32, #tpu.memory_space<vmem>>) attributes {dimension_semantics = [#tpu.dimension_semantics<parallel>], iteration_bounds = array<i64: 2>, scalar_prefetch = 0 : i64, scratch_operands = 0 : i64, tpu.core_type = #tpu.core_type<tc>, window_params = [{transform_indices = @transform_0, window_bounds = array<i64: 1, 4, 256>}, {transform_indices = @transform_1, window_bounds = array<i64: 3>}, {transform_indices = @transform_2, window_bounds = array<i64: 1, 4, 256>}]} {
    %c0 = arith.constant 0 : index
    %c0_0 = arith.constant 0 : index
    %c0_1 = arith.constant 0 : index
    %0 = vector.load %arg1[%c0, %c0_0, %c0_1] : memref<1x4x256xf32, #tpu.memory_space<vmem>>, vector<1x4x256xf32>
    %cst = arith.constant dense<0.000000e+00> : vector<1x4xf32>
    %1 = vector.multi_reduction <add>, %0, %cst [2] : vector<1x4x256xf32> to vector<1x4xf32>
    %cst_2 = arith.constant 3.906250e-03 : f32
    %2 = vector.broadcast %cst_2 : f32 to vector<1x4xf32>
    %3 = arith.mulf %1, %2 : vector<1x4xf32>
    %4 = tpu.iota {dimensions = array<i32: 1>} : vector<1x4xi32>
    %c1 = arith.constant 1 : index
    %5 = memref.load %arg2[%c1] : memref<3xf32, #tpu.memory_space<smem>>
    %6 = vector.broadcast %5 : f32 to vector<1x4xf32>
    %7 = arith.mulf %6, %3 : vector<1x4xf32>
    %c1_i32 = arith.constant 1 : i32
    %8 = tpu.dynamic_rotate %3 by %c1_i32 dim 1 : vector<1x4xf32>, i32 -> vector<1x4xf32>
    %c1_i32_3 = arith.constant 1 : i32
    %9 = vector.broadcast %c1_i32_3 : i32 to vector<1x4xi32>
    %10 = arith.cmpi sge, %4, %9 : vector<1x4xi32>
    %c5_i32 = arith.constant 5 : i32
    %11 = vector.broadcast %c5_i32 : i32 to vector<1x4xi32>
    %12 = arith.cmpi slt, %4, %11 : vector<1x4xi32>
    %13 = arith.andi %10, %12 : vector<1x4xi1>
    %c0_4 = arith.constant 0 : index
    %14 = memref.load %arg2[%c0_4] : memref<3xf32, #tpu.memory_space<smem>>
    %cst_5 = arith.constant 0.000000e+00 : f32
    %15 = vector.broadcast %cst_5 : f32 to vector<1x4xf32>
    %16 = arith.select %13, %8, %15 : vector<1x4xi1>, vector<1x4xf32>
    %17 = vector.broadcast %14 : f32 to vector<1x4xf32>
    %18 = arith.mulf %17, %16 : vector<1x4xf32>
    %19 = arith.addf %7, %18 : vector<1x4xf32>
    %c3_i32 = arith.constant 3 : i32
    %20 = tpu.dynamic_rotate %3 by %c3_i32 dim 1 : vector<1x4xf32>, i32 -> vector<1x4xf32>
    %c-1_i32 = arith.constant -1 : i32
    %21 = vector.broadcast %c-1_i32 : i32 to vector<1x4xi32>
    %22 = arith.cmpi sge, %4, %21 : vector<1x4xi32>
    %c3_i32_6 = arith.constant 3 : i32
    %23 = vector.broadcast %c3_i32_6 : i32 to vector<1x4xi32>
    %24 = arith.cmpi slt, %4, %23 : vector<1x4xi32>
    %25 = arith.andi %22, %24 : vector<1x4xi1>
    %c2 = arith.constant 2 : index
    %26 = memref.load %arg2[%c2] : memref<3xf32, #tpu.memory_space<smem>>
    %cst_7 = arith.constant 0.000000e+00 : f32
    %27 = vector.broadcast %cst_7 : f32 to vector<1x4xf32>
    %28 = arith.select %25, %20, %27 : vector<1x4xi1>, vector<1x4xf32>
    %29 = vector.broadcast %26 : f32 to vector<1x4xf32>
    %30 = arith.mulf %29, %28 : vector<1x4xf32>
    %31 = arith.addf %19, %30 : vector<1x4xf32>
    %c0_8 = arith.constant 0 : index
    %c0_9 = arith.constant 0 : index
    %c0_10 = arith.constant 0 : index
    %32 = vector.load %arg1[%c0_8, %c0_9, %c0_10] : memref<1x4x256xf32, #tpu.memory_space<vmem>>, vector<1x4x256xf32>
    %33 = arith.negf %31 : vector<1x4xf32>
    %34 = math.exp %33 : vector<1x4xf32>
    %cst_11 = arith.constant 1.000000e+00 : f32
    %35 = vector.broadcast %cst_11 : f32 to vector<1x4xf32>
    %36 = arith.addf %35, %34 : vector<1x4xf32>
    %37 = arith.divf %35, %36 : vector<1x4xf32>
    %38 = vector.shape_cast %37 : vector<1x4xf32> to vector<1x4x1xf32>
    %39 = vector.broadcast %38 : vector<1x4x1xf32> to vector<1x4x256xf32>
    %40 = arith.mulf %32, %39 : vector<1x4x256xf32>
    %c0_12 = arith.constant 0 : index
    %c0_13 = arith.constant 0 : index
    %c0_14 = arith.constant 0 : index
    %41 = vector.load %arg3[%c0_12, %c0_13, %c0_14] : memref<1x4x256xf32, #tpu.memory_space<vmem>>, vector<1x4x256xf32>
    tpu.vector_store %arg3[%c0_12, %c0_13, %c0_14], %40 {strides = array<i32>} : memref<1x4x256xf32, #tpu.memory_space<vmem>>, vector<1x4x256xf32>,
    return
  }
  func.func @transform_0(%arg0: i32) -> (i32, i32, i32) {
    %c0_i32 = arith.constant 0 : i32
    %c0_i32_0 = arith.constant 0 : i32
    %c0_i32_1 = arith.constant 0 : i32
    return %arg0, %c0_i32, %c0_i32_0 : i32, i32, i32
  }
  func.func @transform_1(%arg0: i32) -> i32 {
    %c0_i32 = arith.constant 0 : i32
    %c0_i32_0 = arith.constant 0 : i32
    return %c0_i32 : i32
  }
  func.func @transform_2(%arg0: i32) -> (i32, i32, i32) {
    %c0_i32 = arith.constant 0 : i32
    %c0_i32_0 = arith.constant 0 : i32
    %c0_i32_1 = arith.constant 0 : i32
    return %arg0, %c0_i32, %c0_i32_0 : i32, i32, i32
  }
}

</mosaic_0001>

<llo_original>
// kernel: tpu_custom_call.1
$region0: #{tpu_custom_call.1}
  #allocation0 [shape = 'u32[]', space=smem, size = 0x4, offset = 0x4, fixed_abs, tag = 'smem constant byte address 0x4 - core index']
  #allocation1 [shape = 'u32[144,128]{1,0:T(1,128)}', space=vmem, size = 0x12000, scoped, tag = 'internal scratch']
  %s0 = inlined_call_operand.hbm [shape: f32[2,4,256], index: 0, kind: input, shape index: {}]
  %s1 = inlined_call_operand.vmem [shape: f32[3], index: 1, kind: input, shape index: {}]
  %s2 = inlined_call_operand.hbm [shape: f32[2,4,256], index: 2, kind: output, shape index: {}]
  %s3 = sld [smem:[#allocation0]]
  $region49: #{tpu_custom_call.1} parent=0
    _
  %s5 = ssub.s32 1, %s3
  %s6 = scalar_select 0, %s5, %s3
  $region1: #{tpu_custom_call.1} parent=0
    #allocation2 [shape = 'u8[8192]{0}', space=vmem, size = 0x2000, scoped, tag = 'input window, operand 0']
    #allocation3 [shape = 's32[2]{0}', space=sflag, size = 0x8, scoped, tag = 'scoped memory for tpu_custom_call.1']
    #allocation4 [shape = 's32[2]{0}', space=sflag, size = 0x8, scoped, tag = 'scoped memory for tpu_custom_call.1']
    #allocation5 [shape = 's32[2]{0}', space=sflag, size = 0x8, scoped, tag = 'scoped memory for tpu_custom_call.1']
    #allocation6 [shape = 'u8[512]{0}', space=smem, size = 0x200, scoped, tag = 'input window, operand 1, single buffered']
    #allocation7 [shape = 'u8[8192]{0}', space=vmem, size = 0x2000, scoped, tag = 'output window, operand 0']
    %7 = vsyncpa [#allocation3], 0
    %s8 = scalar_lea.sflag [#allocation3], 1
    %9 = vsyncpa %s8, 0
    %10 = vsyncpa [#allocation5], 0
    %11 = vsyncpa [#allocation4], 0
    %s12 = scalar_lea.sflag [#allocation4], 1
    %13 = vsyncpa %s12, 0
    loop: start=0, step=1, limit=4
    $region2: #{tpu_custom_call.1} parent=1 // loop_pre_header
      _
    $region3: #{tpu_custom_call.1} parent=1 // loop_header
      %s15 = sphi 0, %s19
      %p16 = scmp.ge.s32.totalorder %s15, 4
      %s25 = sphi 0, %s27
      %s28 = sphi 0, %s25
      %s29 = sphi 0, %s28
      %s45 = sphi 0, %s29
      %s49 = sphi 0, %s49
      %s51 = sphi 0, %s49
      %s52 = sphi 0, %s51
      %s66 = sphi 0, %s52
      %s72 = sphi 0, %s74
      %s75 = sphi 0, %s72
      %s76 = sphi 0, %s75
      %s92 = sphi 0, %s76
    $region4: #{tpu_custom_call.1} parent=1 // loop_header_branch
      %18 = sbr.rel (%p16) target = $region8
    $region5: #{tpu_custom_call.1} parent=1 // loop_body
      %s20 = ssub.s32 %s15, 1
      %s21 = ssub.s32 %s15, 2
      %s22 = sadd.s32 %s15, 1
      %s23 = ssub.s32 %s15, %s22
      %p24 = scmp.eq.s32.totalorder %s23, 0
      %s26 = sadd.s32 %s25, 1
      %s27 = scalar_select %p24, %s25, %s26
      %p30 = pneg %p24
      %p31 = scmp.eq.s32.totalorder %s15, 1
      %p32 = por %p30, %p31
      %p33 = scmp.ne.s32.totalorder %s25, %s28
      %p34 = scmp.eq.s32.totalorder %s15, 0
      %p35 = por %p33, %p34
      %p36 = scmp.ne.s32.totalorder %s25, %s28
      %p37 = scmp.eq.s32.totalorder %s20, 1
      %p38 = por %p36, %p37
      %p39 = scmp.ne.s32.totalorder %s28, %s29
      %p40 = scmp.eq.s32.totalorder %s20, 0
      %p41 = por %p39, %p40
      %p42 = scmp.ne.s32.totalorder %s28, %s29
      %p43 = scmp.eq.s32.totalorder %s21, 1
      %p44 = por %p42, %p43
      %p46 = scmp.ne.s32.totalorder %s29, %s45
      %p47 = scmp.eq.s32.totalorder %s21, 0
      %p48 = por %p46, %p47
      %s50 = sadd.s32 %s49, 1
      %p53 = scmp.eq.s32.totalorder %s15, 1
      %p54 = scmp.ne.s32.totalorder %s49, %s51
      %p55 = scmp.eq.s32.totalorder %s15, 0
      %p56 = por %p54, %p55
      %p57 = scmp.ne.s32.totalorder %s49, %s51
      %p58 = scmp.eq.s32.totalorder %s20, 1
      %p59 = por %p57, %p58
      %p60 = scmp.ne.s32.totalorder %s51, %s52
      %p61 = scmp.eq.s32.totalorder %s20, 0
      %p62 = por %p60, %p61
      %p63 = scmp.ne.s32.totalorder %s51, %s52
      %p64 = scmp.eq.s32.totalorder %s21, 1
      %p65 = por %p63, %p64
      %p67 = scmp.ne.s32.totalorder %s52, %s66
      %p68 = scmp.eq.s32.totalorder %s21, 0
      %p69 = por %p67, %p68
      %s70 = ssub.s32 %s15, %s22
      %p71 = scmp.eq.s32.totalorder %s70, 0
      %s73 = sadd.s32 %s72, 1
      %s74 = scalar_select %p71, %s72, %s73
      %p77 = pneg %p71
      %p78 = scmp.eq.s32.totalorder %s15, 1
      %p79 = por %p77, %p78
      %p80 = scmp.ne.s32.totalorder %s72, %s75
      %p81 = scmp.eq.s32.totalorder %s15, 0
      %p82 = por %p80, %p81
      %p83 = scmp.ne.s32.totalorder %s72, %s75
      %p84 = scmp.eq.s32.totalorder %s20, 1
      %p85 = por %p83, %p84
      %p86 = scmp.ne.s32.totalorder %s75, %s76
      %p87 = scmp.eq.s32.totalorder %s20, 0
      %p88 = por %p86, %p87
      %p89 = scmp.ne.s32.totalorder %s75, %s76
      %p90 = scmp.eq.s32.totalorder %s21, 1
      %p91 = por %p89, %p90
      %p93 = scmp.ne.s32.totalorder %s76, %s92
      %p94 = scmp.eq.s32.totalorder %s21, 0
      %p95 = por %p93, %p94
      %p96 = scmp.le.s32.totalorder 1, %s15
      %p97 = scmp.lt.s32.totalorder %s15, 3
      %p98 = pnand %p96, %p97
      %p99 = pneg %p98
      // Predicated region
      $region9: #{tpu_custom_call.1} parent=5 // pred_check
        _
      $region10: #{tpu_custom_call.1} parent=5 // pred_check_branch
        %101 = sbr.rel (%p98) target = $region12
      $region11: #{tpu_custom_call.1} parent=5 // pred_region
        %s102 = ssub.s32 %s15, 1
        // Predicated region
        $region13: #{tpu_custom_call.1} parent=11 // pred_check
          %p103 = pneg %p62
        $region14: #{tpu_custom_call.1} parent=11 // pred_check_branch
          %105 = sbr.rel (%p103) target = $region16
        $region15: #{tpu_custom_call.1} parent=11 // pred_region
          %s107 = ssub.s32 16, 16
          %108 = vsyncadd [#allocation5], %s107
          %s110 = sshll.u32 %s1, 4
          %s111 = int_to_ptr.vmem [resolvable:$true] %s110
          %113 = dma.vmem_to_smem %s111, 16, [#allocation6], [#allocation5]
        $region16: #{tpu_custom_call.1} parent=11 // pred_fallthru
          _
      $region12: #{tpu_custom_call.1} parent=5 // pred_fallthru
        _
      %p114 = scmp.lt.s32.totalorder %s15, 2
      // Predicated region
      $region17: #{tpu_custom_call.1} parent=5 // pred_check
        %p115 = pneg %p114
      $region18: #{tpu_custom_call.1} parent=5 // pred_check_branch
        %117 = sbr.rel (%p115) target = $region20
      $region19: #{tpu_custom_call.1} parent=5 // pred_region
        // Predicated region
        $region21: #{tpu_custom_call.1} parent=19 // pred_check
          %p118 = pneg %p35
        $region22: #{tpu_custom_call.1} parent=19 // pred_check_branch
          %120 = sbr.rel (%p118) target = $region24
        $region23: #{tpu_custom_call.1} parent=19 // pred_region
          %s121 = sand.u32 %s25, 1
          %s122 = scalar_lea.sflag [#allocation3], %s121
          %s123 = sand.u32 %s25, 1
          %s124 = smul.addr %s123, 8
          %s125 = scalar_lea.vmem [#allocation2], %s124
          %s127 = ssub.s32 128, 128
          %128 = vsyncadd %s122, %s127
          %s129 = smul.addr %s15, 2
          %s130 = smul.addr %s129, 64
          %s131 = scalar_lea.hbm %s0, %s130
          %s133 = sshll.u32 %s125, 4
          %s134 = int_to_ptr.vmem [resolvable:$true] %s133
          %136 = dma.hbm_to_vmem [thread:$0]  %s131, 128, %s134, %s122
        $region24: #{tpu_custom_call.1} parent=19 // pred_fallthru
          _
      $region20: #{tpu_custom_call.1} parent=5 // pred_fallthru
        _
      %p137 = scmp.le.s32.totalorder 1, %s15
      %p138 = scmp.lt.s32.totalorder %s15, 3
      %p139 = pnand %p137, %p138
      %p140 = pneg %p139
      // Predicated region
      $region25: #{tpu_custom_call.1} parent=5 // pred_check
        _
      $region26: #{tpu_custom_call.1} parent=5 // pred_check_branch
        %142 = sbr.rel (%p139) target = $region28
      $region27: #{tpu_custom_call.1} parent=5 // pred_region
        %s143 = ssub.s32 %s15, 1
        %s144 = sand.u32 %s28, 1
        %s145 = scalar_lea.sflag [#allocation3], %s144
        %s146 = sand.u32 %s28, 1
        %s147 = smul.addr %s146, 8
        %s148 = scalar_lea.vmem [#allocation2], %s147
        // Predicated region
        $region29: #{tpu_custom_call.1} parent=27 // pred_check
          %p149 = pneg %p41
        $region30: #{tpu_custom_call.1} parent=27 // pred_check_branch
          %151 = sbr.rel (%p149) target = $region32
        $region31: #{tpu_custom_call.1} parent=27 // pred_region
          %152 = dma.done %s145, 128
        $region32: #{tpu_custom_call.1} parent=27 // pred_fallthru
          _
        // Predicated region
        $region33: #{tpu_custom_call.1} parent=27 // pred_check
          %p153 = pneg %p62
        $region34: #{tpu_custom_call.1} parent=27 // pred_check_branch
          %155 = sbr.rel (%p153) target = $region36
        $region35: #{tpu_custom_call.1} parent=27 // pred_region
          %156 = dma.done [#allocation5], 16
        $region36: #{tpu_custom_call.1} parent=27 // pred_fallthru
          _
        %157 = sfence
        %s158 = sand.u32 %s28, 1
        %s159 = scalar_lea.sflag [#allocation3], %s158
        %s160 = sand.u32 %s28, 1
        %s161 = smul.addr %s160, 8
        %s162 = scalar_lea.vmem [#allocation2], %s161
        %p163 = pneg %p41
        %p164 = pneg %p38
        %p165 = pneg %p62
        %p166 = pneg %p59
        %p167 = pneg %p88
        %p168 = pneg %p85
        %s169 = sand.u32 %s75, 1
        %s170 = scalar_lea.sflag [#allocation4], %s169
        %s171 = sand.u32 %s75, 1
        %s172 = smul.addr %s171, 8
        %s173 = scalar_lea.vmem [#allocation7], %s172
        %v174 = vld [vmem:[%s148] sm:$0xff]
        %v176 = vcombine.high %v174, %v174
        %vm178 = vcmask 1043456
        %v179 = vsel %vm178, %v174, 0.0
        %v180 = vsel %vm178, %v176, 0.0
        %v181 = vadd.f32 %v179, %v180
        %182 = vadd.xlane.f32.xlu0 %v181
        %v183 = vpop.xlane.xlu0 %182
        %v184 = vmul.f32 %v183, 0.00390625
        %v185 = vlaneseq
        %v186 = vand.u32 %v185, 127
        %s187 = sld [smem:[#allocation6 + $0x1]]
        %v188 = vstv %s187
        %v189 = vmul.f32 %v188, %v184
        %v191 = vlaneseq
        %v192 = vshrl.u32 %v191, 7
        %v193 = vsub.s32 %v186, %v192
        %v194 = vrot.slane %v184, %v193
        %vm196 = vcmask 1047584
        %197 = vrot.lane.b32.xlu0 %v194, 4
        %v198 = vpop.permute.xlu0 %197
        %v199 = vsel %vm196, %v198, %v194
        %200 = vrot.lane.b32.xlu0 %v199, 4
        %v201 = vpop.permute.xlu0 %200
        %v202 = vsel %vm196, %v201, %v194
        %vm203 = vcmp.ge.s32.totalorder %v186, 1
        %vm204 = vcmp.lt.s32.totalorder %v186, 5
        %vm205 = vmand %vm203, %vm204
        %s206 = sld [smem:[#allocation6]]
        %208 = vrot.lane.b32.xlu0 %v202, 125
        %v209 = vpop.permute.xlu0 %208
        %v211 = vsel %vm205, %v209, 0.0
        %v212 = vstv %s206
        %v213 = vmul.f32 %v212, %v211
        %v215 = vlaneseq
        %v216 = vshrl.u32 %v215, 7
        %v217 = vsub.s32 0, %v216
        %v218 = vrot.slane %v213, %v217
        %220 = vbcast.lane.b32.xlu0 %v218, 256
        %v221 = vpop.permute.xlu0 %220
        %v223 = vadd.f32 %v189, %v221
        %vm224 = vcmp.ge.s32.totalorder %v186, 4294967295
        %vm225 = vcmp.lt.s32.totalorder %v186, 3
        %vm226 = vmand %vm224, %vm225
        %s227 = sld [smem:[#allocation6 + $0x2]]
        %228 = vrot.lane.b32.xlu0 %v202, 127
        %v229 = vpop.permute.xlu0 %228
        %v231 = vsel %vm226, %v229, 0.0
        %v232 = vstv %s227
        %v233 = vmul.f32 %v232, %v231
        %v235 = vlaneseq
        %v236 = vshrl.u32 %v235, 7
        %v237 = vsub.s32 0, %v236
        %v238 = vrot.slane %v233, %v237
        %240 = vbcast.lane.b32.xlu0 %v238, 256
        %v241 = vpop.permute.xlu0 %240
        %v243 = vadd.f32 %v223, %v241
        %v244 = vxor.u32 %v243, 2147483648
        %v245 = vmul.f32 %v244, 1.442695
        %v246 = vpow.pop %v245
        %v247 = vadd.f32 %v246, 1.0
        %v248 = vrcp.pop %v247
        %v249 = vmul.f32 1.0, %v248
        %251 = vset.pattern.permute.xlu0 0
        %252 = vperm.xlu0 %251, %v249
        %v253 = vpop.permute.xlu0 %252
        %v255 = vunpack.c.l.s4 839922192
        %v256 = vunpack.c.0.s8 %v255
        %v257 = vlaneseq
        %v258 = vshrl.u32 %v257, 7
        %v259 = vsub.s32 %v256, %v258
        %v260 = vrot.slane %v253, %v259
        %v262 = vmul.f32 %v174, %v260
        %263 = vst [vmem:[%s173] sm:$0xff] %v262
        %s264 = sand.u32 %s75, 1
        %s265 = scalar_lea.sflag [#allocation4], %s264
        %s266 = sand.u32 %s75, 1
        %s267 = smul.addr %s266, 8
        %s268 = scalar_lea.vmem [#allocation7], %s267
        // Predicated region
        $region37: #{tpu_custom_call.1} parent=27 // pred_check
          %p269 = pneg %p85
        $region38: #{tpu_custom_call.1} parent=27 // pred_check_branch
          %271 = sbr.rel (%p269) target = $region40
        $region39: #{tpu_custom_call.1} parent=27 // pred_region
          %s273 = ssub.s32 128, 128
          %274 = vsyncadd %s265, %s273
          %s275 = smul.addr %s20, 2
          %s276 = smul.addr %s275, 64
          %s277 = scalar_lea.hbm %s2, %s276
          %s279 = sshll.u32 %s268, 4
          %s280 = int_to_ptr.vmem [resolvable:$true] %s279
          %282 = dma.vmem_to_hbm [thread:$0]  %s280, 128, %s277, %s265
        $region40: #{tpu_custom_call.1} parent=27 // pred_fallthru
          _
      $region28: #{tpu_custom_call.1} parent=5 // pred_fallthru
        _
      %p283 = scmp.le.s32.totalorder 2, %s15
      // Predicated region
      $region41: #{tpu_custom_call.1} parent=5 // pred_check
        %p284 = pneg %p283
      $region42: #{tpu_custom_call.1} parent=5 // pred_check_branch
        %286 = sbr.rel (%p284) target = $region44
      $region43: #{tpu_custom_call.1} parent=5 // pred_region
        %s287 = ssub.s32 %s15, 2
        // Predicated region
        $region45: #{tpu_custom_call.1} parent=43 // pred_check
          %p288 = pneg %p91
        $region46: #{tpu_custom_call.1} parent=43 // pred_check_branch
          %290 = sbr.rel (%p288) target = $region48
        $region47: #{tpu_custom_call.1} parent=43 // pred_region
          %s291 = sand.u32 %s76, 1
          %s292 = scalar_lea.sflag [#allocation4], %s291
          %s293 = sand.u32 %s76, 1
          %s294 = smul.addr %s293, 8
          %s295 = scalar_lea.vmem [#allocation7], %s294
          %296 = dma.done %s292, 128
        $region48: #{tpu_custom_call.1} parent=43 // pred_fallthru
          _
      $region44: #{tpu_custom_call.1} parent=5 // pred_fallthru
        _
    $region6: #{tpu_custom_call.1} parent=1 // loop_footer
      %s19 = sadd.s32 1, %s15
    $region7: #{tpu_custom_call.1} parent=1 // loop_footer_branch
      %14 = sbr.rel target = $region3
    $region8: #{tpu_custom_call.1} parent=1 // loop_exit
      _
    %297 = vsyncpa [#allocation3], 1
    %s298 = scalar_lea.sflag [#allocation3], 1
    %299 = vsyncpa %s298, 1
    %300 = vsyncpa [#allocation4], 1
    %s301 = scalar_lea.sflag [#allocation4], 1
    %302 = vsyncpa %s301, 1
    %303 = vsyncpa [#allocation5], 1
    %s304 = scalar_lea.sflag [#allocation5], 1
    %305 = vsyncpa %s304, 1

</llo_original>
